<compile_context>
chip_gen: v5e
topology: v5e:2x2
jax: 0.10.0
libtpu: 0.0.40
codegen_flags: <defaults>
</compile_context>

<pallas_src>
import math

import jax
import jax.numpy as jnp
from jax.experimental import pallas as pl
from jax.experimental.pallas import tpu as pltpu


def _round_up(n, m):
    return ((n + m - 1) // m) * m


# ----------------------------- kernels --------------------------------------

def _affine_kernel(x_ref, w_ref, b_ref, o_ref):
    """Single K-step: one MXU matmul + f32 bias add per row tile."""
    acc = jnp.dot(x_ref[...], w_ref[...], preferred_element_type=jnp.float32)
    o_ref[...] = (acc + b_ref[...]).astype(o_ref.dtype)


def _affine_kernel_ktiled(x_ref, w_ref, b_ref, o_ref, acc_ref):
    """K-tiled variant (P3 accumulator) for fused weights too big for VMEM."""
    k = pl.program_id(1)

    @pl.when(k == 0)
    def _():
        acc_ref[...] = jnp.zeros_like(acc_ref)

    acc_ref[...] += jnp.dot(x_ref[...], w_ref[...],
                            preferred_element_type=jnp.float32)

    @pl.when(k == pl.num_programs(1) - 1)
    def _():
        o_ref[...] = (acc_ref[...] + b_ref[...]).astype(o_ref.dtype)


# ------------------------- one-time preparation ------------------------------

def fuse_affine_chain(weights, biases, *, compute_dtype=jnp.float32):
    """Fuse the activation-free Linear chain into (W_fused, b_fused).

    Call ONCE at weight-load time and cache the result; the per-call forward
    (`forward_fused`) then performs a single Pallas matmul.

    Args:
      weights: list of (in_i, out_i) arrays (PyTorch weight.T layout).
      biases:  list of (out_i,) arrays.
      compute_dtype: dtype of the cached fused weight fed to the MXU
        (jnp.float32 for exactness, jnp.bfloat16 for v6e/v7x deployment).
    Returns:
      w_fused: (in_dim, out_dim) compute_dtype
      b_fused: (1, out_dim) float32
    """
    w_fused = weights[0].astype(jnp.float32)
    b_fused = biases[0].astype(jnp.float32)
    for w_i, b_i in zip(weights[1:], biases[1:]):
        w_i = w_i.astype(jnp.float32)
        b_fused = b_fused @ w_i + b_i.astype(jnp.float32)
        w_fused = w_fused @ w_i
    return w_fused.astype(compute_dtype), b_fused.reshape(1, -1)


# ------------------------------ forward --------------------------------------

def forward_fused(x, w_fused, b_fused, *, row_tile=512):
    """Per-call path: (optional batch-row pad of x) -> one pallas_call."""
    compute_dtype = w_fused.dtype
    batch, in_dim = x.shape
    k_dim, out_dim = w_fused.shape
    assert in_dim == k_dim, "x feature dim must match fused weight"

    sub = 16 if compute_dtype == jnp.bfloat16 else 8
    itemsize = jnp.dtype(compute_dtype).itemsize

    # ---- batch (row) tiling: pad rows only, never the lane dim -------------
    b_up = _round_up(batch, sub)
    if b_up >= 2 * sub:
        # At least 2 grid steps so the "parallel" axis can use both TCs on
        # v7x; row_tile keeps large-batch tiles near the HBM roofline.
        rt = min(row_tile, _round_up((b_up + 1) // 2, sub))
    else:
        rt = b_up
    batch_pad = _round_up(batch, rt)

    x_c = x.astype(compute_dtype)
    if batch_pad != batch:
        x_c = jnp.zeros((batch_pad, in_dim), compute_dtype).at[:batch].set(x_c)

    # ---- K tiling only when the fused weight is too large for VMEM ---------
    w_bytes = in_dim * out_dim * itemsize
    k_tiled = (w_bytes > 8 * 1024 * 1024) and (in_dim % 128 == 0)
    # TODO(synk): if w_bytes is huge AND in_dim is not a 128 multiple we would
    # also have to lane-pad x's K dim; that case falls back to single-K here.

    cost = pl.CostEstimate(
        flops=2 * batch_pad * in_dim * out_dim,
        transcendentals=0,
        bytes_accessed=(batch_pad * in_dim * itemsize
                        + in_dim * out_dim * itemsize
                        + out_dim * 4
                        + batch_pad * out_dim * x.dtype.itemsize),
    )

    if not k_tiled:
        grid = (batch_pad // rt,)
        out_p = pl.pallas_call(
            _affine_kernel,
            out_shape=jax.ShapeDtypeStruct((batch_pad, out_dim), x.dtype),
            grid=grid,
            in_specs=[
                pl.BlockSpec((rt, in_dim), lambda i: (i, 0)),      # x row tile
                pl.BlockSpec((in_dim, out_dim), lambda i: (0, 0)),  # fused W
                pl.BlockSpec((1, out_dim), lambda i: (0, 0)),       # fused bias
            ],
            out_specs=pl.BlockSpec((rt, out_dim), lambda i: (i, 0)),
            compiler_params=pltpu.CompilerParams(
                dimension_semantics=("parallel",)),
            cost_estimate=cost,
        )(x_c, w_fused, b_fused)
    else:
        # K grid axis (arbitrary) + f32 accumulator scratch: keeps the fused W
        # resident footprint bounded on v7x's smaller VMEM.
        tk = 512 if in_dim % 512 == 0 else (256 if in_dim % 256 == 0 else 128)
        grid = (batch_pad // rt, in_dim // tk)
        out_p = pl.pallas_call(
            _affine_kernel_ktiled,
            out_shape=jax.ShapeDtypeStruct((batch_pad, out_dim), x.dtype),
            grid=grid,
            in_specs=[
                pl.BlockSpec((rt, tk), lambda i, k: (i, k)),
                pl.BlockSpec((tk, out_dim), lambda i, k: (k, 0)),
                pl.BlockSpec((1, out_dim), lambda i, k: (0, 0)),
            ],
            out_specs=pl.BlockSpec((rt, out_dim), lambda i, k: (i, 0)),
            scratch_shapes=[pltpu.VMEM((rt, out_dim), jnp.float32)],
            compiler_params=pltpu.CompilerParams(
                dimension_semantics=("parallel", "arbitrary")),
            cost_estimate=cost,
        )(x_c, w_fused, b_fused)

    if batch_pad != batch:
        out_p = out_p[:batch]
    return out_p


def dynamic_parameter_identifier(x, weights, biases, *,
                                 compute_dtype=jnp.float32, row_tile=512):
    """Convenience one-shot wrapper (fuse + forward). For repeated calls,
    cache the result of `fuse_affine_chain` and call `forward_fused`."""
    w_fused, b_fused = fuse_affine_chain(weights, biases,
                                         compute_dtype=compute_dtype)
    return forward_fused(x, w_fused, b_fused, row_tile=row_tile)


# ------------------------------ test ----------------------------------------

def init_linear_params(key, in_features, out_features):
    """Deterministic init mimicking PyTorch nn.Linear default U(+-1/sqrt(in))."""
    kw, kb = jax.random.split(key)
    bound = 1.0 / math.sqrt(in_features)
    # Stored as (in, out) == PyTorch weight.T
    w = jax.random.uniform(kw, (in_features, out_features), jnp.float32,
                           minval=-bound, maxval=bound)
    b = jax.random.uniform(kb, (out_features,), jnp.float32,
                           minval=-bound, maxval=bound)
    return w, b


if __name__ == "__main__":
    # Small shapes consistent with the module's forward.
    batch = 8
    input_size = 32
    layer_sizes = [64, 32]
    output_size = 16

    key = jax.random.PRNGKey(0)
    keys = jax.random.split(key, len(layer_sizes) + 2)

    dims = [input_size] + list(layer_sizes) + [output_size]
    weights, biases = [], []
    for i, (din, dout) in enumerate(zip(dims[:-1], dims[1:])):
        w, b = init_linear_params(keys[i], din, dout)
        weights.append(w)
        biases.append(b)

    x = jax.random.normal(keys[-1], (batch, input_size), jnp.float32)

    # One-time prepare (cached across calls in a real deployment).
    w_fused, b_fused = fuse_affine_chain(weights, biases,
                                         compute_dtype=jnp.float32)
    w_fused, b_fused = jax.block_until_ready((w_fused, b_fused))

    out = forward_fused(x, w_fused, b_fused)
    out = jax.block_until_ready(out)

    # Pure-JAX reference (layer-by-layer, same semantics as the PyTorch module).
    ref = x
    for w, b in zip(weights, biases):
        ref = ref @ w + b

    assert out.shape == (batch, output_size)
    assert jnp.allclose(out, ref, atol=1e-4, rtol=1e-4)

    print("KERNEL_OK")
</pallas_src>

<mosaic_0001>
module attributes {stable_mosaic.version = 11 : i64} {
  func.func @_affine_kernel(%arg0: i32, %arg1: memref<8x32xf32, #tpu.memory_space<vmem>>, %arg2: memref<32x16xf32, #tpu.memory_space<vmem>>, %arg3: memref<1x16xf32, #tpu.memory_space<vmem>>, %arg4: memref<8x16xf32, #tpu.memory_space<vmem>>) attributes {dimension_semantics = [#tpu.dimension_semantics<parallel>], iteration_bounds = array<i64: 1>, scalar_prefetch = 0 : i64, scratch_operands = 0 : i64, tpu.core_type = #tpu.core_type<tc>, window_params = [{transform_indices = @transform_0, window_bounds = array<i64: 8, 32>}, {pipeline_mode = #tpu.pipeline_mode<synchronous>, transform_indices = @transform_1, window_bounds = array<i64: 32, 16>}, {pipeline_mode = #tpu.pipeline_mode<synchronous>, transform_indices = @transform_2, window_bounds = array<i64: 1, 16>}, {transform_indices = @transform_3, window_bounds = array<i64: 8, 16>}]} {
    %c0 = arith.constant 0 : index
    %c0_0 = arith.constant 0 : index
    %0 = vector.load %arg1[%c0, %c0_0] : memref<8x32xf32, #tpu.memory_space<vmem>>, vector<8x32xf32>
    %c0_1 = arith.constant 0 : index
    %c0_2 = arith.constant 0 : index
    %1 = vector.load %arg2[%c0_1, %c0_2] : memref<32x16xf32, #tpu.memory_space<vmem>>, vector<32x16xf32>
    %cst = arith.constant dense<0.000000e+00> : vector<8x16xf32>
    %2 = tpu.matmul %0, %1, %cst {dimension_numbers = #tpu.dot_dimension_numbers<[1], [0], [0], [1], [0, 0, 1, 1], [], []>} : vector<8x32xf32>, vector<32x16xf32>, vector<8x16xf32> -> vector<8x16xf32>
    %c0_3 = arith.constant 0 : index
    %c0_4 = arith.constant 0 : index
    %3 = vector.load %arg3[%c0_3, %c0_4] : memref<1x16xf32, #tpu.memory_space<vmem>>, vector<1x16xf32>
    %4 = vector.broadcast %3 : vector<1x16xf32> to vector<8x16xf32>
    %5 = arith.addf %2, %4 : vector<8x16xf32>
    %c0_5 = arith.constant 0 : index
    %c0_6 = arith.constant 0 : index
    %6 = vector.load %arg4[%c0_5, %c0_6] : memref<8x16xf32, #tpu.memory_space<vmem>>, vector<8x16xf32>
    tpu.vector_store %arg4[%c0_5, %c0_6], %5 {strides = array<i32>} : memref<8x16xf32, #tpu.memory_space<vmem>>, vector<8x16xf32>,
    return
  }
  func.func @transform_0(%arg0: i32) -> (i32, i32) {
    %c0_i32 = arith.constant 0 : i32
    %c0_i32_0 = arith.constant 0 : i32
    return %arg0, %c0_i32 : i32, i32
  }
  func.func @transform_1(%arg0: i32) -> (i32, i32) {
    %c0_i32 = arith.constant 0 : i32
    %c0_i32_0 = arith.constant 0 : i32
    %c0_i32_1 = arith.constant 0 : i32
    return %c0_i32, %c0_i32_0 : i32, i32
  }
  func.func @transform_2(%arg0: i32) -> (i32, i32) {
    %c0_i32 = arith.constant 0 : i32
    %c0_i32_0 = arith.constant 0 : i32
    %c0_i32_1 = arith.constant 0 : i32
    return %c0_i32, %c0_i32_0 : i32, i32
  }
  func.func @transform_3(%arg0: i32) -> (i32, i32) {
    %c0_i32 = arith.constant 0 : i32
    %c0_i32_0 = arith.constant 0 : i32
    return %arg0, %c0_i32 : i32, i32
  }
}

</mosaic_0001>

<llo_original>
// kernel: tpu_custom_call.1
$region0: #{tpu_custom_call.1}
  #allocation0 [shape = 'u32[]', space=smem, size = 0x4, offset = 0x4, fixed_abs, tag = 'smem constant byte address 0x4 - core index']
  #allocation1 [shape = 'u32[72,128]{1,0:T(1,128)}', space=vmem, size = 0x9000, scoped, tag = 'internal scratch']
  %s0 = inlined_call_operand.vmem [shape: f32[8,32], index: 0, kind: input, shape index: {}]
  %s1 = inlined_call_operand.vmem [shape: f32[32,16], index: 1, kind: input, shape index: {}]
  %s2 = inlined_call_operand.vmem [shape: f32[1,16], index: 2, kind: input, shape index: {}]
  %s3 = inlined_call_operand.hbm [shape: f32[8,16], index: 3, kind: output, shape index: {}]
  %s4 = sld [smem:[#allocation0]]
  $region22: #{tpu_custom_call.1} parent=0
    _
  %s6 = ssub.s32 1, %s4
  %s7 = scalar_select 0, %s6, %s4
  $region1: #{tpu_custom_call.1} parent=0
    #allocation2 [shape = 'u8[4096]{0}', space=vmem, size = 0x1000, scoped, tag = 'output window, operand 0, single buffered']
    #allocation3 [shape = 's32[1]{0}', space=sflag, size = 0x4, scoped, tag = 'scoped memory for tpu_custom_call.1']
    %8 = vsyncpa [#allocation3], 0
    // Predicated region
    $region2: #{tpu_custom_call.1} parent=1 // pred_check
      _
    $region3: #{tpu_custom_call.1} parent=1 // pred_check_branch
      %10 = sbr.rel (0) target = $region5
    $region4: #{tpu_custom_call.1} parent=1 // pred_region
      _
    $region5: #{tpu_custom_call.1} parent=1 // pred_fallthru
      _
    // Predicated region
    $region6: #{tpu_custom_call.1} parent=1 // pred_check
      _
    $region7: #{tpu_custom_call.1} parent=1 // pred_check_branch
      %12 = sbr.rel (0) target = $region9
    $region8: #{tpu_custom_call.1} parent=1 // pred_region
      _
    $region9: #{tpu_custom_call.1} parent=1 // pred_fallthru
      _
    // Predicated region
    $region10: #{tpu_custom_call.1} parent=1 // pred_check
      _
    $region11: #{tpu_custom_call.1} parent=1 // pred_check_branch
      %14 = sbr.rel (0) target = $region13
    $region12: #{tpu_custom_call.1} parent=1 // pred_region
      _
    $region13: #{tpu_custom_call.1} parent=1 // pred_fallthru
      _
    %v15 = vld [vmem:[%s0] sm:$0xff]
    %v16 = vld [vmem:[%s1] sm:$0xff]
    %v17 = vld [vmem:[%s1 + $0x8] sm:$0xff]
    %v18 = vld [vmem:[%s1 + $0x10] sm:$0xff]
    %v19 = vld [vmem:[%s1 + $0x18] sm:$0xff]
    %v20 = vld [vmem:[%s2] sm:$0x1]
    %v22 = vperm.slane %v20, 0
    %vm24 = vcmask 261120
    %v26 = vsel %vm24, %v15, 0
    %28 = vmatpush.msra.mxu0 0.0
    %29 = vmatpush.msra.mxu0 0.0
    %30 = vmatpush.msra.mxu0 0.0
    %31 = vmatpush.msra.mxu0 0.0
    %32 = vmatpush.msra.mxu0 0.0
    %33 = vmatpush.msra.mxu0 0.0
    %34 = vmatpush.msra.mxu0 0.0
    %35 = vmatpush.msra.mxu0 0.0
    %36 = vmatpush.msra.mxu0 0.0
    %37 = vmatpush.msra.mxu0 0.0
    %38 = vmatpush.msra.mxu0 0.0
    %39 = vmatpush.msra.mxu0 0.0
    %40 = vmatpush.msra.mxu0 %v19
    %41 = vmatpush.msra.mxu0 %v18
    %42 = vmatpush.msra.mxu0 %v17
    %43 = vmatpush.msra.mxu0 %v16
    %44 = vmatmul.f32.gmra.mxu0 %v26
    %v45 = vpop.f32.mrf.mxu0
    %v46 = vadd.f32 %v22, %v45
    %47 = vdwg.mxu0
    %vm48 = vcmask 130048
    %49 = vst.msk [vmem:[#allocation2] sm:$0xff] %vm48, %v46
    // Predicated region
    $region14: #{tpu_custom_call.1} parent=1 // pred_check
      _
    $region15: #{tpu_custom_call.1} parent=1 // pred_check_branch
      %51 = sbr.rel (0) target = $region17
    $region16: #{tpu_custom_call.1} parent=1 // pred_region
      %53 = vsyncadd [#allocation3], 0
      %s55 = sshll.u32 [#allocation2], 4
      %s56 = int_to_ptr.vmem [resolvable:$true] %s55
      %s57 = sshll.u32 %s3, 4
      %s58 = int_to_ptr.hbm [resolvable:$true] %s57
      %60 = dma.vmem_to_hbm [thread:$0]  %s56, 128, %s58, [#allocation3]
    $region17: #{tpu_custom_call.1} parent=1 // pred_fallthru
      _
    // Predicated region
    $region18: #{tpu_custom_call.1} parent=1 // pred_check
      _
    $region19: #{tpu_custom_call.1} parent=1 // pred_check_branch
      %62 = sbr.rel (0) target = $region21
    $region20: #{tpu_custom_call.1} parent=1 // pred_region
      %64 = dma.done [#allocation3], 128
    $region21: #{tpu_custom_call.1} parent=1 // pred_fallthru
      _
    %65 = vsyncpa [#allocation3], 1

</llo_original>
